<compile_context>
chip_gen: v7x
topology: tpu7x:2x2x1
jax: 0.10.0
libtpu: 0.0.40
codegen_flags: <defaults>
</compile_context>

<pallas_src>
import jax
import jax.numpy as jnp
from jax.experimental import pallas as pl
from jax.experimental.pallas import tpu as pltpu

# Logical layer sizes from the PyTorch module, and their lane-padded versions.
DIMS = [784, 256, 128, 64, 32, 10]
PDIMS = [784, 256, 128, 128, 128, 128]  # 64/32/10 padded to 128 lanes (exact w/ zero pads)
OUT_PAD = PDIMS[-1]                      # real logits live in lanes 0..9


def _round_up(n, m):
    return ((n + m - 1) // m) * m


def _tensorcores_per_chip():
    """Best-effort chip-generation probe: v7x has 2 TensorCores, v5e/v6e have 1."""
    try:
        kind = jax.devices()[0].device_kind.lower()
    except Exception:
        return 1
    return 2 if "v7" in kind else 1


def _choose_batch_tile(B, batch_tile):
    """Balanced tile: pick the tile count first, then size tm from it.

    Keeps batch padding < 16 rows per tile (bf16 sublane granule) instead of up
    to tm-1 rows. On 2-TC chips (v7x) prefer an even number of grid steps so
    the 'parallel' batch axis shards evenly across both TensorCores.
    """
    ntiles = max(1, pl.cdiv(B, batch_tile))
    if _tensorcores_per_chip() >= 2 and B >= 32:
        if ntiles == 1:
            ntiles = 2
        elif ntiles % 2 == 1:
            ntiles += 1
    tm = _round_up(pl.cdiv(B, ntiles), 16)
    grid_n = pl.cdiv(B, tm)
    return tm, grid_n


def mlp_kernel(x_ref,
               w1_ref, b1_ref,
               w2_ref, b2_ref,
               w3_ref, b3_ref,
               w4_ref, b4_ref,
               w5_ref, b5_ref,
               o_ref):
    """Fused 5-layer MLP: f32 x cast to bf16 on the VPU, bf16 MXU matmuls with
    f32 accumulation, ReLU on the VPU, lane-dense bf16 output store."""
    # In-kernel cast: x arrives as f32 (cheap VPU work hidden under DMA/MXU slack).
    h = x_ref[...].astype(jnp.bfloat16)  # (tm, 784)

    h = jnp.dot(h, w1_ref[...], preferred_element_type=jnp.float32) + b1_ref[...]
    h = jnp.maximum(h, 0.0).astype(jnp.bfloat16)

    h = jnp.dot(h, w2_ref[...], preferred_element_type=jnp.float32) + b2_ref[...]
    h = jnp.maximum(h, 0.0).astype(jnp.bfloat16)

    h = jnp.dot(h, w3_ref[...], preferred_element_type=jnp.float32) + b3_ref[...]
    h = jnp.maximum(h, 0.0).astype(jnp.bfloat16)

    h = jnp.dot(h, w4_ref[...], preferred_element_type=jnp.float32) + b4_ref[...]
    h = jnp.maximum(h, 0.0).astype(jnp.bfloat16)

    y = jnp.dot(h, w5_ref[...], preferred_element_type=jnp.float32) + b5_ref[...]
    o_ref[...] = y.astype(o_ref.dtype)  # (tm, 128) bf16, unmasked lane-dense store


def init_params(key):
    """Deterministic parameter init mirroring nn.Linear shapes (stored transposed).

    Pads are NOT baked in here so training-style code sees the true shapes.
    """
    params = []
    for i in range(5):
        fan_in, fan_out = DIMS[i], DIMS[i + 1]
        key, kw, kb = jax.random.split(key, 3)
        bound = 1.0 / (fan_in ** 0.5)  # same scale as nn.Linear default init
        w = jax.random.uniform(kw, (fan_in, fan_out), jnp.float32, -bound, bound)
        b = jax.random.uniform(kb, (1, fan_out), jnp.float32, -bound, bound)
        params += [w, b]
    return params


def _pack_params(params):
    """Cast weights to bf16 (biases stay f32) and zero-pad the small layers to
    128 lanes. Zero weight rows/cols + zero bias lanes + ReLU(0)=0 keep this
    mathematically exact."""
    packed = []
    for layer in range(5):
        w = params[2 * layer]
        b = params[2 * layer + 1]
        fi, fo = DIMS[layer], DIMS[layer + 1]
        pfi, pfo = PDIMS[layer], PDIMS[layer + 1]
        if (pfi, pfo) != (fi, fo):
            w = jnp.pad(w, ((0, pfi - fi), (0, pfo - fo)))
            b = jnp.pad(b, ((0, 0), (0, pfo - fo)))
        packed.append(w.astype(jnp.bfloat16))
        packed.append(b.astype(jnp.float32))
    return packed


def _resident_spec(shape):
    """Grid-invariant (constant index map) block; single-buffered when supported."""
    idx_map = lambda i: (0, 0)
    if hasattr(pl, "Buffered"):
        try:
            return pl.BlockSpec(shape, idx_map, pipeline_mode=pl.Buffered(1))
        except TypeError:
            pass
    return pl.BlockSpec(shape, idx_map)


def mlp_forward(x_nchw, params, *, batch_tile=1024):
    # Glue: the x.view(-1, 28*28) from the PyTorch forward. No dtype cast here
    # (the kernel casts); reshape of a contiguous NCHW tensor is metadata-only.
    B = x_nchw.shape[0]
    x = x_nchw.reshape(B, 28 * 28)

    tm, grid_n = _choose_batch_tile(B, batch_tile)
    Bp = grid_n * tm
    if Bp != B:
        x = jnp.pad(x, ((0, Bp - B), (0, 0)))
    grid = (grid_n,)

    packed = _pack_params(params)

    # Batch-tiled blocks for x/out; constant-index full blocks for the (small,
    # <1 MB bf16 total) padded weights so they stay resident across grid steps.
    x_spec = pl.BlockSpec((tm, PDIMS[0]), lambda i: (i, 0))
    out_spec = pl.BlockSpec((tm, OUT_PAD), lambda i: (i, 0))

    param_specs = []
    for layer in range(5):
        fan_in, fan_out = PDIMS[layer], PDIMS[layer + 1]
        param_specs.append(_resident_spec((fan_in, fan_out)))  # W
        param_specs.append(_resident_spec((1, fan_out)))       # b

    flops = 2 * Bp * sum(PDIMS[i] * PDIMS[i + 1] for i in range(5))
    weight_bytes = sum(PDIMS[i] * PDIMS[i + 1] * 2 + PDIMS[i + 1] * 4 for i in range(5))
    bytes_accessed = Bp * PDIMS[0] * 4 + Bp * OUT_PAD * 2 + weight_bytes

    out_padded = pl.pallas_call(
        mlp_kernel,
        out_shape=jax.ShapeDtypeStruct((Bp, OUT_PAD), jnp.bfloat16),
        grid_spec=pltpu.PrefetchScalarGridSpec(
            num_scalar_prefetch=0,
            grid=grid,
            in_specs=[x_spec] + param_specs,
            out_specs=out_spec,
        ),
        compiler_params=pltpu.CompilerParams(
            dimension_semantics=("parallel",),
            # 32 MiB covers the tm=1024 footprint (~7-8 MiB) everywhere and is
            # within v7x's 64 MiB physical VMEM as well as v5e/v6e's 128 MiB.
            vmem_limit_bytes=32 * 1024 * 1024,
        ),
        cost_estimate=pl.CostEstimate(
            flops=flops, transcendentals=0, bytes_accessed=bytes_accessed),
    )(x, *packed)

    # Drop batch padding and the zero lanes of the padded output (bf16 logits).
    return out_padded[:B, :DIMS[-1]]


def mlp_reference(x_nchw, params):
    """Pure-JAX reference with the same bf16-operand / f32-accumulate precision."""
    B = x_nchw.shape[0]
    h = x_nchw.reshape(B, 28 * 28).astype(jnp.bfloat16)
    for layer in range(5):
        w, b = params[2 * layer], params[2 * layer + 1]
        h = jnp.dot(h, w.astype(jnp.bfloat16),
                    preferred_element_type=jnp.float32) + b
        if layer < 4:
            h = jnp.maximum(h, 0.0).astype(jnp.bfloat16)
    return h  # f32 logits


if __name__ == "__main__":
    key = jax.random.PRNGKey(0)
    key, kx = jax.random.split(key)

    # Small MNIST-like batch: NCHW (B, 1, 28, 28).
    B = 8
    x = jax.random.normal(kx, (B, 1, 28, 28), dtype=jnp.float32)

    params = init_params(jax.random.PRNGKey(0))

    y = mlp_forward(x, params)
    y = jax.block_until_ready(y)

    y_ref = mlp_reference(x, params)
    assert y.shape == (B, 10), y.shape
    # bf16 final store + bf16 operands => loosened tolerance vs. f32.
    assert jnp.allclose(y.astype(jnp.float32), y_ref, atol=2e-2, rtol=2e-2), \
        "mismatch vs reference"

    print("KERNEL_OK")
</pallas_src>

<mosaic_0001>
module attributes {stable_mosaic.version = 11 : i64} {
  func.func @mlp_kernel(%arg0: i32, %arg1: memref<16x784xf32, #tpu.memory_space<vmem>>, %arg2: memref<784x256xbf16, #tpu.memory_space<vmem>>, %arg3: memref<1x256xf32, #tpu.memory_space<vmem>>, %arg4: memref<256x128xbf16, #tpu.memory_space<vmem>>, %arg5: memref<1x128xf32, #tpu.memory_space<vmem>>, %arg6: memref<128x128xbf16, #tpu.memory_space<vmem>>, %arg7: memref<1x128xf32, #tpu.memory_space<vmem>>, %arg8: memref<128x128xbf16, #tpu.memory_space<vmem>>, %arg9: memref<1x128xf32, #tpu.memory_space<vmem>>, %arg10: memref<128x128xbf16, #tpu.memory_space<vmem>>, %arg11: memref<1x128xf32, #tpu.memory_space<vmem>>, %arg12: memref<16x128xbf16, #tpu.memory_space<vmem>>) attributes {dimension_semantics = [#tpu.dimension_semantics<parallel>], iteration_bounds = array<i64: 1>, scalar_prefetch = 0 : i64, scratch_operands = 0 : i64, tpu.core_type = #tpu.core_type<tc>, window_params = [{transform_indices = @transform_0, window_bounds = array<i64: 16, 784>}, {pipeline_mode = #tpu.pipeline_mode<synchronous>, transform_indices = @transform_1, window_bounds = array<i64: 784, 256>}, {pipeline_mode = #tpu.pipeline_mode<synchronous>, transform_indices = @transform_2, window_bounds = array<i64: 1, 256>}, {pipeline_mode = #tpu.pipeline_mode<synchronous>, transform_indices = @transform_3, window_bounds = array<i64: 256, 128>}, {pipeline_mode = #tpu.pipeline_mode<synchronous>, transform_indices = @transform_4, window_bounds = array<i64: 1, 128>}, {pipeline_mode = #tpu.pipeline_mode<synchronous>, transform_indices = @transform_5, window_bounds = array<i64: 128, 128>}, {pipeline_mode = #tpu.pipeline_mode<synchronous>, transform_indices = @transform_6, window_bounds = array<i64: 1, 128>}, {pipeline_mode = #tpu.pipeline_mode<synchronous>, transform_indices = @transform_7, window_bounds = array<i64: 128, 128>}, {pipeline_mode = #tpu.pipeline_mode<synchronous>, transform_indices = @transform_8, window_bounds = array<i64: 1, 128>}, {pipeline_mode = #tpu.pipeline_mode<synchronous>, transform_indices = @transform_9, window_bounds = array<i64: 128, 128>}, {pipeline_mode = #tpu.pipeline_mode<synchronous>, transform_indices = @transform_10, window_bounds = array<i64: 1, 128>}, {transform_indices = @transform_11, window_bounds = array<i64: 16, 128>}]} {
    %c0 = arith.constant 0 : index
    %c0_0 = arith.constant 0 : index
    %0 = vector.load %arg1[%c0, %c0_0] : memref<16x784xf32, #tpu.memory_space<vmem>>, vector<16x784xf32>
    %1 = arith.truncf %0 : vector<16x784xf32> to vector<16x784xbf16>
    %c0_1 = arith.constant 0 : index
    %c0_2 = arith.constant 0 : index
    %2 = vector.load %arg2[%c0_1, %c0_2] : memref<784x256xbf16, #tpu.memory_space<vmem>>, vector<784x256xbf16>
    %cst = arith.constant dense<0.000000e+00> : vector<16x256xf32>
    %3 = tpu.matmul %1, %2, %cst {dimension_numbers = #tpu.dot_dimension_numbers<[1], [0], [0], [1], [0, 0, 1, 1], [], []>} : vector<16x784xbf16>, vector<784x256xbf16>, vector<16x256xf32> -> vector<16x256xf32>
    %c0_3 = arith.constant 0 : index
    %c0_4 = arith.constant 0 : index
    %4 = vector.load %arg3[%c0_3, %c0_4] : memref<1x256xf32, #tpu.memory_space<vmem>>, vector<1x256xf32>
    %5 = vector.broadcast %4 : vector<1x256xf32> to vector<16x256xf32>
    %6 = arith.addf %3, %5 : vector<16x256xf32>
    %cst_5 = arith.constant 0.000000e+00 : f32
    %7 = vector.broadcast %cst_5 : f32 to vector<16x256xf32>
    %8 = arith.maximumf %6, %7 : vector<16x256xf32>
    %9 = arith.truncf %8 : vector<16x256xf32> to vector<16x256xbf16>
    %c0_6 = arith.constant 0 : index
    %c0_7 = arith.constant 0 : index
    %10 = vector.load %arg4[%c0_6, %c0_7] : memref<256x128xbf16, #tpu.memory_space<vmem>>, vector<256x128xbf16>
    %cst_8 = arith.constant dense<0.000000e+00> : vector<16x128xf32>
    %11 = tpu.matmul %9, %10, %cst_8 {dimension_numbers = #tpu.dot_dimension_numbers<[1], [0], [0], [1], [0, 0, 1, 1], [], []>} : vector<16x256xbf16>, vector<256x128xbf16>, vector<16x128xf32> -> vector<16x128xf32>
    %c0_9 = arith.constant 0 : index
    %c0_10 = arith.constant 0 : index
    %12 = vector.load %arg5[%c0_9, %c0_10] : memref<1x128xf32, #tpu.memory_space<vmem>>, vector<1x128xf32>
    %13 = vector.broadcast %12 : vector<1x128xf32> to vector<16x128xf32>
    %14 = arith.addf %11, %13 : vector<16x128xf32>
    %cst_11 = arith.constant 0.000000e+00 : f32
    %15 = vector.broadcast %cst_11 : f32 to vector<16x128xf32>
    %16 = arith.maximumf %14, %15 : vector<16x128xf32>
    %17 = arith.truncf %16 : vector<16x128xf32> to vector<16x128xbf16>
    %c0_12 = arith.constant 0 : index
    %c0_13 = arith.constant 0 : index
    %18 = vector.load %arg6[%c0_12, %c0_13] : memref<128x128xbf16, #tpu.memory_space<vmem>>, vector<128x128xbf16>
    %cst_14 = arith.constant dense<0.000000e+00> : vector<16x128xf32>
    %19 = tpu.matmul %17, %18, %cst_14 {dimension_numbers = #tpu.dot_dimension_numbers<[1], [0], [0], [1], [0, 0, 1, 1], [], []>} : vector<16x128xbf16>, vector<128x128xbf16>, vector<16x128xf32> -> vector<16x128xf32>
    %c0_15 = arith.constant 0 : index
    %c0_16 = arith.constant 0 : index
    %20 = vector.load %arg7[%c0_15, %c0_16] : memref<1x128xf32, #tpu.memory_space<vmem>>, vector<1x128xf32>
    %21 = vector.broadcast %20 : vector<1x128xf32> to vector<16x128xf32>
    %22 = arith.addf %19, %21 : vector<16x128xf32>
    %cst_17 = arith.constant 0.000000e+00 : f32
    %23 = vector.broadcast %cst_17 : f32 to vector<16x128xf32>
    %24 = arith.maximumf %22, %23 : vector<16x128xf32>
    %25 = arith.truncf %24 : vector<16x128xf32> to vector<16x128xbf16>
    %c0_18 = arith.constant 0 : index
    %c0_19 = arith.constant 0 : index
    %26 = vector.load %arg8[%c0_18, %c0_19] : memref<128x128xbf16, #tpu.memory_space<vmem>>, vector<128x128xbf16>
    %cst_20 = arith.constant dense<0.000000e+00> : vector<16x128xf32>
    %27 = tpu.matmul %25, %26, %cst_20 {dimension_numbers = #tpu.dot_dimension_numbers<[1], [0], [0], [1], [0, 0, 1, 1], [], []>} : vector<16x128xbf16>, vector<128x128xbf16>, vector<16x128xf32> -> vector<16x128xf32>
    %c0_21 = arith.constant 0 : index
    %c0_22 = arith.constant 0 : index
    %28 = vector.load %arg9[%c0_21, %c0_22] : memref<1x128xf32, #tpu.memory_space<vmem>>, vector<1x128xf32>
    %29 = vector.broadcast %28 : vector<1x128xf32> to vector<16x128xf32>
    %30 = arith.addf %27, %29 : vector<16x128xf32>
    %cst_23 = arith.constant 0.000000e+00 : f32
    %31 = vector.broadcast %cst_23 : f32 to vector<16x128xf32>
    %32 = arith.maximumf %30, %31 : vector<16x128xf32>
    %33 = arith.truncf %32 : vector<16x128xf32> to vector<16x128xbf16>
    %c0_24 = arith.constant 0 : index
    %c0_25 = arith.constant 0 : index
    %34 = vector.load %arg10[%c0_24, %c0_25] : memref<128x128xbf16, #tpu.memory_space<vmem>>, vector<128x128xbf16>
    %cst_26 = arith.constant dense<0.000000e+00> : vector<16x128xf32>
    %35 = tpu.matmul %33, %34, %cst_26 {dimension_numbers = #tpu.dot_dimension_numbers<[1], [0], [0], [1], [0, 0, 1, 1], [], []>} : vector<16x128xbf16>, vector<128x128xbf16>, vector<16x128xf32> -> vector<16x128xf32>
    %c0_27 = arith.constant 0 : index
    %c0_28 = arith.constant 0 : index
    %36 = vector.load %arg11[%c0_27, %c0_28] : memref<1x128xf32, #tpu.memory_space<vmem>>, vector<1x128xf32>
    %37 = vector.broadcast %36 : vector<1x128xf32> to vector<16x128xf32>
    %38 = arith.addf %35, %37 : vector<16x128xf32>
    %39 = arith.truncf %38 : vector<16x128xf32> to vector<16x128xbf16>
    %c0_29 = arith.constant 0 : index
    %c0_30 = arith.constant 0 : index
    %40 = vector.load %arg12[%c0_29, %c0_30] : memref<16x128xbf16, #tpu.memory_space<vmem>>, vector<16x128xbf16>
    tpu.vector_store %arg12[%c0_29, %c0_30], %39 {strides = array<i32>} : memref<16x128xbf16, #tpu.memory_space<vmem>>, vector<16x128xbf16>,
    return
  }
  func.func @transform_0(%arg0: i32) -> (i32, i32) {
    %c0_i32 = arith.constant 0 : i32
    %c0_i32_0 = arith.constant 0 : i32
    return %arg0, %c0_i32 : i32, i32
  }
  func.func @transform_1(%arg0: i32) -> (i32, i32) {
    %c0_i32 = arith.constant 0 : i32
    %c0_i32_0 = arith.constant 0 : i32
    %c0_i32_1 = arith.constant 0 : i32
    return %c0_i32, %c0_i32_0 : i32, i32
  }
  func.func @transform_2(%arg0: i32) -> (i32, i32) {
    %c0_i32 = arith.constant 0 : i32
    %c0_i32_0 = arith.constant 0 : i32
    %c0_i32_1 = arith.constant 0 : i32
    return %c0_i32, %c0_i32_0 : i32, i32
  }
  func.func @transform_3(%arg0: i32) -> (i32, i32) {
    %c0_i32 = arith.constant 0 : i32
    %c0_i32_0 = arith.constant 0 : i32
    %c0_i32_1 = arith.constant 0 : i32
    return %c0_i32, %c0_i32_0 : i32, i32
  }
  func.func @transform_4(%arg0: i32) -> (i32, i32) {
    %c0_i32 = arith.constant 0 : i32
    %c0_i32_0 = arith.constant 0 : i32
    %c0_i32_1 = arith.constant 0 : i32
    return %c0_i32, %c0_i32_0 : i32, i32
  }
  func.func @transform_5(%arg0: i32) -> (i32, i32) {
    %c0_i32 = arith.constant 0 : i32
    %c0_i32_0 = arith.constant 0 : i32
    %c0_i32_1 = arith.constant 0 : i32
    return %c0_i32, %c0_i32_0 : i32, i32
  }
  func.func @transform_6(%arg0: i32) -> (i32, i32) {
    %c0_i32 = arith.constant 0 : i32
    %c0_i32_0 = arith.constant 0 : i32
    %c0_i32_1 = arith.constant 0 : i32
    return %c0_i32, %c0_i32_0 : i32, i32
  }
  func.func @transform_7(%arg0: i32) -> (i32, i32) {
    %c0_i32 = arith.constant 0 : i32
    %c0_i32_0 = arith.constant 0 : i32
    %c0_i32_1 = arith.constant 0 : i32
    return %c0_i32, %c0_i32_0 : i32, i32
  }
  func.func @transform_8(%arg0: i32) -> (i32, i32) {
    %c0_i32 = arith.constant 0 : i32
    %c0_i32_0 = arith.constant 0 : i32
    %c0_i32_1 = arith.constant 0 : i32
    return %c0_i32, %c0_i32_0 : i32, i32
  }
  func.func @transform_9(%arg0: i32) -> (i32, i32) {
    %c0_i32 = arith.constant 0 : i32
    %c0_i32_0 = arith.constant 0 : i32
    %c0_i32_1 = arith.constant 0 : i32
    return %c0_i32, %c0_i32_0 : i32, i32
  }
  func.func @transform_10(%arg0: i32) -> (i32, i32) {
    %c0_i32 = arith.constant 0 : i32
    %c0_i32_0 = arith.constant 0 : i32
    %c0_i32_1 = arith.constant 0 : i32
    return %c0_i32, %c0_i32_0 : i32, i32
  }
  func.func @transform_11(%arg0: i32) -> (i32, i32) {
    %c0_i32 = arith.constant 0 : i32
    %c0_i32_0 = arith.constant 0 : i32
    return %arg0, %c0_i32 : i32, i32
  }
}

</mosaic_0001>

<llo_original>
// kernel: tpu_custom_call.1
$region0: #{tpu_custom_call.1}
  #allocation0 [shape = 'u32[]', space=smem, size = 0x4, offset = 0x4, fixed_abs, tag = 'smem constant byte address 0x4 - core index']
  #allocation1 [shape = 'u32[144,128]{1,0:T(1,128)}', space=vmem, size = 0x12000, scoped, tag = 'internal scratch']
  %s0 = inlined_call_operand.hbm [shape: f32[16,784], index: 0, kind: input, shape index: {}]
  %s1 = inlined_call_operand.hbm [shape: bf16[784,256], index: 1, kind: input, shape index: {}]
  %s2 = inlined_call_operand.vmem [shape: f32[1,256], index: 2, kind: input, shape index: {}]
  %s3 = inlined_call_operand.hbm [shape: bf16[256,128], index: 3, kind: input, shape index: {}]
  %s4 = inlined_call_operand.vmem [shape: f32[1,128], index: 4, kind: input, shape index: {}]
  %s5 = inlined_call_operand.hbm [shape: bf16[128,128], index: 5, kind: input, shape index: {}]
  %s6 = inlined_call_operand.vmem [shape: f32[1,128], index: 6, kind: input, shape index: {}]
  %s7 = inlined_call_operand.hbm [shape: bf16[128,128], index: 7, kind: input, shape index: {}]
  %s8 = inlined_call_operand.vmem [shape: f32[1,128], index: 8, kind: input, shape index: {}]
  %s9 = inlined_call_operand.hbm [shape: bf16[128,128], index: 9, kind: input, shape index: {}]
  %s10 = inlined_call_operand.vmem [shape: f32[1,128], index: 10, kind: input, shape index: {}]
  %s11 = inlined_call_operand.hbm [shape: bf16[16,128], index: 11, kind: output, shape index: {}]
  %s12 = sld [smem:[#allocation0]]
  $region78: #{tpu_custom_call.1} parent=0
    _
  %s14 = ssub.s32 1, %s12
  %s15 = scalar_select 0, %s14, %s12
  $region1: #{tpu_custom_call.1} parent=0
    #allocation2 [shape = 'u8[57344]{0}', space=vmem, size = 0xe000, scoped, tag = 'input window, operand 0, single buffered']
    #allocation3 [shape = 's32[1]{0}', space=sflag, size = 0x4, scoped, tag = 'scoped memory for tpu_custom_call.1']
    #allocation4 [shape = 's32[1]{0}', space=sflag, size = 0x4, scoped, tag = 'scoped memory for tpu_custom_call.1']
    #allocation5 [shape = 'u8[401408]{0}', space=vmem, size = 0x62000, scoped, tag = 'input window, operand 1, single buffered']
    #allocation6 [shape = 's32[1]{0}', space=sflag, size = 0x4, scoped, tag = 'scoped memory for tpu_custom_call.1']
    #allocation7 [shape = 'u8[65536]{0}', space=vmem, size = 0x10000, scoped, tag = 'input window, operand 3, single buffered']
    #allocation8 [shape = 'u8[32768]{0}', space=vmem, size = 0x8000, scoped, tag = 'input window, operand 5, single buffered']
    #allocation9 [shape = 's32[1]{0}', space=sflag, size = 0x4, scoped, tag = 'scoped memory for tpu_custom_call.1']
    #allocation10 [shape = 'u8[32768]{0}', space=vmem, size = 0x8000, scoped, tag = 'input window, operand 7, single buffered']
    #allocation11 [shape = 'u8[32768]{0}', space=vmem, size = 0x8000, scoped, tag = 'input window, operand 9, single buffered']
    #allocation12 [shape = 's32[1]{0}', space=sflag, size = 0x4, scoped, tag = 'scoped memory for tpu_custom_call.1']
    #allocation13 [shape = 'u8[4096]{0}', space=vmem, size = 0x1000, scoped, tag = 'output window, operand 0, single buffered']
    %16 = vsyncpa [#allocation3], 0
    %17 = vsyncpa [#allocation6], 0
    %18 = vsyncpa [#allocation9], 0
    %19 = vsyncpa [#allocation12], 0
    %20 = vsyncpa [#allocation4], 0
    // Predicated region
    $region2: #{tpu_custom_call.1} parent=1 // pred_check
      _
    $region3: #{tpu_custom_call.1} parent=1 // pred_check_branch
      %22 = sbr.rel (0) target = $region5
    $region4: #{tpu_custom_call.1} parent=1 // pred_region
      %s24 = ssub.s32 1792, 1792
      %25 = vsyncadd [#allocation3], %s24
      %s26 = sshll.u32 [#allocation2], 4
      %s27 = int_to_ptr.vmem [resolvable:$true] %s26
      %32 = dma.hbm_to_vmem [thread:$0]  %s0, 1792, %s27, [#allocation3], 896, 896, 56
    $region5: #{tpu_custom_call.1} parent=1 // pred_fallthru
      _
    // Predicated region
    $region6: #{tpu_custom_call.1} parent=1 // pred_check
      _
    $region7: #{tpu_custom_call.1} parent=1 // pred_check_branch
      %34 = sbr.rel (0) target = $region9
    $region8: #{tpu_custom_call.1} parent=1 // pred_region
      %s36 = ssub.s32 12544, 12544
      %37 = vsyncadd [#allocation6], %s36
      %s38 = sshll.u32 [#allocation5], 4
      %s39 = int_to_ptr.vmem [resolvable:$true] %s38
      %44 = dma.hbm_to_vmem [thread:$0]  %s1, 12544, %s39, [#allocation6], 128, 128, 8
    $region9: #{tpu_custom_call.1} parent=1 // pred_fallthru
      _
    // Predicated region
    $region10: #{tpu_custom_call.1} parent=1 // pred_check
      _
    $region11: #{tpu_custom_call.1} parent=1 // pred_check_branch
      %46 = sbr.rel (0) target = $region13
    $region12: #{tpu_custom_call.1} parent=1 // pred_region
      _
    $region13: #{tpu_custom_call.1} parent=1 // pred_fallthru
      _
    // Predicated region
    $region14: #{tpu_custom_call.1} parent=1 // pred_check
      _
    $region15: #{tpu_custom_call.1} parent=1 // pred_check_branch
      %48 = sbr.rel (0) target = $region17
    $region16: #{tpu_custom_call.1} parent=1 // pred_region
      %s50 = ssub.s32 2048, 2048
      %51 = vsyncadd [#allocation6], %s50
      %s52 = sshll.u32 [#allocation7], 4
      %s53 = int_to_ptr.vmem [resolvable:$true] %s52
      %58 = dma.hbm_to_vmem [thread:$0]  %s3, 2048, %s53, [#allocation6], 64, 64, 4
    $region17: #{tpu_custom_call.1} parent=1 // pred_fallthru
      _
    // Predicated region
    $region18: #{tpu_custom_call.1} parent=1 // pred_check
      _
    $region19: #{tpu_custom_call.1} parent=1 // pred_check_branch
      %60 = sbr.rel (0) target = $region21
    $region20: #{tpu_custom_call.1} parent=1 // pred_region
      _
    $region21: #{tpu_custom_call.1} parent=1 // pred_fallthru
      _
    // Predicated region
    $region22: #{tpu_custom_call.1} parent=1 // pred_check
      _
    $region23: #{tpu_custom_call.1} parent=1 // pred_check_branch
      %62 = sbr.rel (0) target = $region25
    $region24: #{tpu_custom_call.1} parent=1 // pred_region
      %s64 = ssub.s32 1024, 1024
      %65 = vsyncadd [#allocation9], %s64
      %s66 = sshll.u32 [#allocation8], 4
      %s67 = int_to_ptr.vmem [resolvable:$true] %s66
      %72 = dma.hbm_to_vmem [thread:$0]  %s5, 1024, %s67, [#allocation9], 64, 64, 4
    $region25: #{tpu_custom_call.1} parent=1 // pred_fallthru
      _
    // Predicated region
    $region26: #{tpu_custom_call.1} parent=1 // pred_check
      _
    $region27: #{tpu_custom_call.1} parent=1 // pred_check_branch
      %74 = sbr.rel (0) target = $region29
    $region28: #{tpu_custom_call.1} parent=1 // pred_region
      _
    $region29: #{tpu_custom_call.1} parent=1 // pred_fallthru
      _
    // Predicated region
    $region30: #{tpu_custom_call.1} parent=1 // pred_check
      _
    $region31: #{tpu_custom_call.1} parent=1 // pred_check_branch
      %76 = sbr.rel (0) target = $region33
    $region32: #{tpu_custom_call.1} parent=1 // pred_region
      %s78 = ssub.s32 1024, 1024
      %79 = vsyncadd [#allocation9], %s78
      %s80 = sshll.u32 [#allocation10], 4
      %s81 = int_to_ptr.vmem [resolvable:$true] %s80
      %86 = dma.hbm_to_vmem [thread:$0]  %s7, 1024, %s81, [#allocation9], 64, 64, 4
    $region33: #{tpu_custom_call.1} parent=1 // pred_fallthru
      _
    // Predicated region
    $region34: #{tpu_custom_call.1} parent=1 // pred_check
      _
    $region35: #{tpu_custom_call.1} parent=1 // pred_check_branch
      %88 = sbr.rel (0) target = $region37
    $region36: #{tpu_custom_call.1} parent=1 // pred_region
      _
    $region37: #{tpu_custom_call.1} parent=1 // pred_fallthru
      _
    // Predicated region
    $region38: #{tpu_custom_call.1} parent=1 // pred_check
      _
    $region39: #{tpu_custom_call.1} parent=1 // pred_check_branch
      %90 = sbr.rel (0) target = $region41
    $region40: #{tpu_custom_call.1} parent=1 // pred_region
      %s92 = ssub.s32 1024, 1024
      %93 = vsyncadd [#allocation12], %s92
      %s94 = sshll.u32 [#allocation11], 4
      %s95 = int_to_ptr.vmem [resolvable:$true] %s94
      %100 = dma.hbm_to_vmem [thread:$0]  %s9, 1024, %s95, [#allocation12], 64, 64, 4
    $region41: #{tpu_custom_call.1} parent=1 // pred_fallthru
      _
    // Predicated region
    $region42: #{tpu_custom_call.1} parent=1 // pred_check
      _
    $region43: #{tpu_custom_call.1} parent=1 // pred_check_branch
      %102 = sbr.rel (0) target = $region45
    $region44: #{tpu_custom_call.1} parent=1 // pred_region
      _
    $region45: #{tpu_custom_call.1} parent=1 // pred_fallthru
      _
    // Predicated region
    $region46: #{tpu_custom_call.1} parent=1 // pred_check
      _
    $region47: #{tpu_custom_call.1} parent=1 // pred_check_branch
      %104 = sbr.rel (0) target = $region49
    $region48: #{tpu_custom_call.1} parent=1 // pred_region
      %105 = dma.done [#allocation3], 1792
    $region49: #{tpu_custom_call.1} parent=1 // pred_fallthru
      _
    // Predicated region
    $region50: #{tpu_custom_call.1} parent=1 // pred_check
      _
    $region51: #{tpu_custom_call.1} parent=1 // pred_check_branch
      %107 = sbr.rel (0) target = $region53
    $region52: #{tpu_custom_call.1} parent=1 // pred_region
      %108 = dma.done [#allocation6], 12544
    $region53: #{tpu_custom_call.1} parent=1 // pred_fallthru
      _
    // Predicated region
    $region54: #{tpu_custom_call.1} parent=1 // pred_check
      _
    $region55: #{tpu_custom_call.1} parent=1 // pred_check_branch
      %110 = sbr.rel (0) target = $region57
    $region56: #{tpu_custom_call.1} parent=1 // pred_region
      %111 = dma.done [#allocation6], 2048
    $region57: #{tpu_custom_call.1} parent=1 // pred_fallthru
      _
    // Predicated region
    $region58: #{tpu_custom_call.1} parent=1 // pred_check
      _
    $region59: #{tpu_custom_call.1} parent=1 // pred_check_branch
      %113 = sbr.rel (0) target = $region61
    $region60: #{tpu_custom_call.1} parent=1 // pred_region
      %114 = dma.done [#allocation9], 1024
    $region61: #{tpu_custom_call.1} parent=1 // pred_fallthru
      _
    // Predicated region
    $region62: #{tpu_custom_call.1} parent=1 // pred_check
      _
    $region63: #{tpu_custom_call.1} parent=1 // pred_check_branch
      %116 = sbr.rel (0) target = $region65
    $region64: #{tpu_custom_call.1} parent=1 // pred_region
      %117 = dma.done [#allocation9], 1024
    $region65: #{tpu_custom_call.1} parent=1 // pred_fallthru
      _
    // Predicated region
    $region66: #{tpu_custom_call.1} parent=1 // pred_check
      _
    $region67: #{tpu_custom_call.1} parent=1 // pred_check_branch
      %119 = sbr.rel (0) target = $region69
    $region68: #{tpu_custom_call.1} parent=1 // pred_region
      %120 = dma.done [#allocation12], 1024
    $region69: #{tpu_custom_call.1} parent=1 // pred_fallthru
      _
    %v122 = vld [vmem:[#allocation2] sm:$0xff]
    %v123 = vld [vmem:[#allocation2 + $0x8] sm:$0xff]
    %v124 = vld [vmem:[#allocation2 + $0x10] sm:$0xff]
    %v125 = vld [vmem:[#allocation2 + $0x18] sm:$0xff]
    %v126 = vld [vmem:[#allocation2 + $0x20] sm:$0xff]
    %v127 = vld [vmem:[#allocation2 + $0x28] sm:$0xff]
    %v128 = vld [vmem:[#allocation2 + $0x30] sm:$0xff]
    %v129 = vld [vmem:[#allocation2 + $0x38] sm:$0xff]
    %v130 = vld [vmem:[#allocation2 + $0x40] sm:$0xff]
    %v131 = vld [vmem:[#allocation2 + $0x48] sm:$0xff]
    %v132 = vld [vmem:[#allocation2 + $0x50] sm:$0xff]
    %v133 = vld [vmem:[#allocation2 + $0x58] sm:$0xff]
    %v134 = vld [vmem:[#allocation2 + $0x60] sm:$0xff]
    %v135 = vld [vmem:[#allocation2 + $0x68] sm:$0xff]
    %v136 = vpack.c.bf16 %v129, %v122
    %v137 = vpack.c.bf16 %v130, %v123
    %v138 = vpack.c.bf16 %v131, %v124
    %v139 = vpack.c.bf16 %v132, %v125
    %v140 = vpack.c.bf16 %v133, %v126
    %v141 = vpack.c.bf16 %v134, %v127
    %v142 = vpack.c.bf16 %v135, %v128
    %v143 = vld [vmem:[#allocation5] sm:$0xff]
    %v144 = vld [vmem:[#allocation5 + $0x8] sm:$0xff]
    %v145 = vld [vmem:[#allocation5 + $0x10] sm:$0xff]
    %v146 = vld [vmem:[#allocation5 + $0x18] sm:$0xff]
    %v147 = vld [vmem:[#allocation5 + $0x20] sm:$0xff]
    %v148 = vld [vmem:[#allocation5 + $0x28] sm:$0xff]
    %v149 = vld [vmem:[#allocation5 + $0x30] sm:$0xff]
    %v150 = vld [vmem:[#allocation5 + $0x38] sm:$0xff]
    %v151 = vld [vmem:[#allocation5 + $0x40] sm:$0xff]
    %v152 = vld [vmem:[#allocation5 + $0x48] sm:$0xff]
    %v153 = vld [vmem:[#allocation5 + $0x50] sm:$0xff]
    %v154 = vld [vmem:[#allocation5 + $0x58] sm:$0xff]
    %v155 = vld [vmem:[#allocation5 + $0x60] sm:$0xff]
    %v156 = vld [vmem:[#allocation5 + $0x68] sm:$0xff]
    %v157 = vld [vmem:[#allocation5 + $0x70] sm:$0xff]
    %v158 = vld [vmem:[#allocation5 + $0x78] sm:$0xff]
    %v159 = vld [vmem:[#allocation5 + $0x80] sm:$0xff]
    %v160 = vld [vmem:[#allocation5 + $0x88] sm:$0xff]
    %v161 = vld [vmem:[#allocation5 + $0x90] sm:$0xff]
    %v162 = vld [vmem:[#allocation5 + $0x98] sm:$0xff]
    %v163 = vld [vmem:[#allocation5 + $0xa0] sm:$0xff]
    %v164 = vld [vmem:[#allocation5 + $0xa8] sm:$0xff]
    %v165 = vld [vmem:[#allocation5 + $0xb0] sm:$0xff]
    %v166 = vld [vmem:[#allocation5 + $0xb8] sm:$0xff]
    %v167 = vld [vmem:[#allocation5 + $0xc0] sm:$0xff]
    %v168 = vld [vmem:[#allocation5 + $0xc8] sm:$0xff]
    %v169 = vld [vmem:[#allocation5 + $0xd0] sm:$0xff]
    %v170 = vld [vmem:[#allocation5 + $0xd8] sm:$0xff]
    %v171 = vld [vmem:[#allocation5 + $0xe0] sm:$0xff]
    %v172 = vld [vmem:[#allocation5 + $0xe8] sm:$0xff]
    %v173 = vld [vmem:[#allocation5 + $0xf0] sm:$0xff]
    %v174 = vld [vmem:[#allocation5 + $0xf8] sm:$0xff]
    %v175 = vld [vmem:[#allocation5 + $0x100] sm:$0xff]
    %v176 = vld [vmem:[#allocation5 + $0x108] sm:$0xff]
    %v177 = vld [vmem:[#allocation5 + $0x110] sm:$0xff]
    %v178 = vld [vmem:[#allocation5 + $0x118] sm:$0xff]
    %v179 = vld [vmem:[#allocation5 + $0x120] sm:$0xff]
    %v180 = vld [vmem:[#allocation5 + $0x128] sm:$0xff]
    %v181 = vld [vmem:[#allocation5 + $0x130] sm:$0xff]
    %v182 = vld [vmem:[#allocation5 + $0x138] sm:$0xff]
    %v183 = vld [vmem:[#allocation5 + $0x140] sm:$0xff]
    %v184 = vld [vmem:[#allocation5 + $0x148] sm:$0xff]
    %v185 = vld [vmem:[#allocation5 + $0x150] sm:$0xff]
    %v186 = vld [vmem:[#allocation5 + $0x158] sm:$0xff]
    %v187 = vld [vmem:[#allocation5 + $0x160] sm:$0xff]
    %v188 = vld [vmem:[#allocation5 + $0x168] sm:$0xff]
    %v189 = vld [vmem:[#allocation5 + $0x170] sm:$0xff]
    %v190 = vld [vmem:[#allocation5 + $0x178] sm:$0xff]
    %v191 = vld [vmem:[#allocation5 + $0x180] sm:$0xff]
    %v192 = vld [vmem:[#allocation5 + $0x188] sm:$0xff]
    %v193 = vld [vmem:[#allocation5 + $0x190] sm:$0xff]
    %v194 = vld [vmem:[#allocation5 + $0x198] sm:$0xff]
    %v195 = vld [vmem:[#allocation5 + $0x1a0] sm:$0xff]
    %v196 = vld [vmem:[#allocation5 + $0x1a8] sm:$0xff]
    %v197 = vld [vmem:[#allocation5 + $0x1b0] sm:$0xff]
    %v198 = vld [vmem:[#allocation5 + $0x1b8] sm:$0xff]
    %v199 = vld [vmem:[#allocation5 + $0x1c0] sm:$0xff]
    %v200 = vld [vmem:[#allocation5 + $0x1c8] sm:$0xff]
    %v201 = vld [vmem:[#allocation5 + $0x1d0] sm:$0xff]
    %v202 = vld [vmem:[#allocation5 + $0x1d8] sm:$0xff]
    %v203 = vld [vmem:[#allocation5 + $0x1e0] sm:$0xff]
    %v204 = vld [vmem:[#allocation5 + $0x1e8] sm:$0xff]
    %v205 = vld [vmem:[#allocation5 + $0x1f0] sm:$0xff]
    %v206 = vld [vmem:[#allocation5 + $0x1f8] sm:$0xff]
    %v207 = vld [vmem:[#allocation5 + $0x200] sm:$0xff]
    %v208 = vld [vmem:[#allocation5 + $0x208] sm:$0xff]
    %v209 = vld [vmem:[#allocation5 + $0x210] sm:$0xff]
    %v210 = vld [vmem:[#allocation5 + $0x218] sm:$0xff]
    %v211 = vld [vmem:[#allocation5 + $0x220] sm:$0xff]
    %v212 = vld [vmem:[#allocation5 + $0x228] sm:$0xff]
    %v213 = vld [vmem:[#allocation5 + $0x230] sm:$0xff]
    %v214 = vld [vmem:[#allocation5 + $0x238] sm:$0xff]
    %v215 = vld [vmem:[#allocation5 + $0x240] sm:$0xff]
    %v216 = vld [vmem:[#allocation5 + $0x248] sm:$0xff]
    %v217 = vld [vmem:[#allocation5 + $0x250] sm:$0xff]
    %v218 = vld [vmem:[#allocation5 + $0x258] sm:$0xff]
    %v219 = vld [vmem:[#allocation5 + $0x260] sm:$0xff]
    %v220 = vld [vmem:[#allocation5 + $0x268] sm:$0xff]
    %v221 = vld [vmem:[#allocation5 + $0x270] sm:$0xff]
    %v222 = vld [vmem:[#allocation5 + $0x278] sm:$0xff]
    %v223 = vld [vmem:[#allocation5 + $0x280] sm:$0xff]
    %v224 = vld [vmem:[#allocation5 + $0x288] sm:$0xff]
    %v225 = vld [vmem:[#allocation5 + $0x290] sm:$0xff]
    %v226 = vld [vmem:[#allocation5 + $0x298] sm:$0xff]
    %v227 = vld [vmem:[#allocation5 + $0x2a0] sm:$0xff]
    %v228 = vld [vmem:[#allocation5 + $0x2a8] sm:$0xff]
    %v229 = vld [vmem:[#allocation5 + $0x2b0] sm:$0xff]
    %v230 = vld [vmem:[#allocation5 + $0x2b8] sm:$0xff]
    %v231 = vld [vmem:[#allocation5 + $0x2c0] sm:$0xff]
    %v232 = vld [vmem:[#allocation5 + $0x2c8] sm:$0xff]
    %v233 = vld [vmem:[#allocation5 + $0x2d0] sm:$0xff]
    %v234 = vld [vmem:[#allocation5 + $0x2d8] sm:$0xff]
    %v235 = vld [vmem:[#allocation5 + $0x2e0] sm:$0xff]
    %v236 = vld [vmem:[#allocation5 + $0x2e8] sm:$0xff]
    %v237 = vld [vmem:[#allocation5 + $0x2f0] sm:$0xff]
    %v238 = vld [vmem:[#allocation5 + $0x2f8] sm:$0xff]
    %v239 = vld [vmem:[#allocation5 + $0x300] sm:$0xff]
    %v240 = vld [vmem:[#allocation5 + $0x308] sm:$0xff]
    %v241 = vld [vmem:[%s2] sm:$0x3]
    %v243 = vlaneseq
    %v244 = vshrl.u32 %v243, 7
    %v245 = vsub.s32 0, %v244
    %v246 = vrot.slane %v241, %v245
    %v247 = vlaneseq
    %v248 = vshrl.u32 %v247, 7
    %v249 = vsub.s32 1, %v248
    %v250 = vrot.slane %v241, %v249
    %v351 = vunpack.c.l.b16 %v143
    %v352 = vunpack.c.h.b16 %v143
    %v353 = vunpack.c.l.b16 %v144
    %v354 = vunpack.c.h.b16 %v144
    %v355 = vunpack.c.l.b16 %v145
    %v356 = vunpack.c.h.b16 %v145
    %v357 = vunpack.c.l.b16 %v146
    %v358 = vunpack.c.h.b16 %v146
    %v359 = vunpack.c.l.b16 %v147
    %v360 = vunpack.c.h.b16 %v147
    %v361 = vunpack.c.l.b16 %v148
    %v362 = vunpack.c.h.b16 %v148
    %v363 = vunpack.c.l.b16 %v149
    %v364 = vunpack.c.h.b16 %v149
    %v365 = vunpack.c.l.b16 %v150
    %v366 = vunpack.c.h.b16 %v150
    %v367 = vunpack.c.l.b16 %v151
    %v368 = vunpack.c.h.b16 %v151
    %v369 = vunpack.c.l.b16 %v152
    %v370 = vunpack.c.h.b16 %v152
    %v371 = vunpack.c.l.b16 %v153
    %v372 = vunpack.c.h.b16 %v153
    %v373 = vunpack.c.l.b16 %v154
    %v374 = vunpack.c.h.b16 %v154
    %v375 = vunpack.c.l.b16 %v155
    %v376 = vunpack.c.h.b16 %v155
    %v377 = vunpack.c.l.b16 %v156
    %v378 = vunpack.c.h.b16 %v156
    %v379 = vunpack.c.l.b16 %v157
    %v380 = vunpack.c.h.b16 %v157
    %v381 = vunpack.c.l.b16 %v158
    %v382 = vunpack.c.h.b16 %v158
    %v383 = vunpack.c.l.b16 %v159
    %v384 = vunpack.c.h.b16 %v159
    %v385 = vunpack.c.l.b16 %v160
    %v386 = vunpack.c.h.b16 %v160
    %v387 = vunpack.c.l.b16 %v161
    %v388 = vunpack.c.h.b16 %v161
    %v389 = vunpack.c.l.b16 %v162
    %v390 = vunpack.c.h.b16 %v162
    %v391 = vunpack.c.l.b16 %v163
    %v392 = vunpack.c.h.b16 %v163
    %v393 = vunpack.c.l.b16 %v164
    %v394 = vunpack.c.h.b16 %v164
    %v395 = vunpack.c.l.b16 %v165
    %v396 = vunpack.c.h.b16 %v165
    %v397 = vunpack.c.l.b16 %v166
    %v398 = vunpack.c.h.b16 %v166
    %v399 = vunpack.c.l.b16 %v167
    %v400 = vunpack.c.h.b16 %v167
    %v401 = vunpack.c.l.b16 %v168
    %v402 = vunpack.c.h.b16 %v168
    %v403 = vunpack.c.l.b16 %v169
    %v404 = vunpack.c.h.b16 %v169
    %v405 = vunpack.c.l.b16 %v170
    %v406 = vunpack.c.h.b16 %v170
    %v407 = vunpack.c.l.b16 %v171
    %v408 = vunpack.c.h.b16 %v171
    %v409 = vunpack.c.l.b16 %v172
    %v410 = vunpack.c.h.b16 %v172
    %v411 = vunpack.c.l.b16 %v173
    %v412 = vunpack.c.h.b16 %v173
    %v413 = vunpack.c.l.b16 %v174
    %v414 = vunpack.c.h.b16 %v174
    %v415 = vunpack.c.l.b16 %v175
    %v416 = vunpack.c.h.b16 %v175
    %v417 = vunpack.c.l.b16 %v176
    %v418 = vunpack.c.h.b16 %v176
    %v419 = vunpack.c.l.b16 %v177
    %v420 = vunpack.c.h.b16 %v177
    %v421 = vunpack.c.l.b16 %v178
    %v422 = vunpack.c.h.b16 %v178
    %v423 = vunpack.c.l.b16 %v179
    %v424 = vunpack.c.h.b16 %v179
    %v425 = vunpack.c.l.b16 %v180
    %v426 = vunpack.c.h.b16 %v180
    %v427 = vunpack.c.l.b16 %v181
    %v428 = vunpack.c.h.b16 %v181
    %v429 = vunpack.c.l.b16 %v182
    %v430 = vunpack.c.h.b16 %v182
    %v431 = vunpack.c.l.b16 %v183
    %v432 = vunpack.c.h.b16 %v183
    %v433 = vunpack.c.l.b16 %v184
    %v434 = vunpack.c.h.b16 %v184
    %v435 = vunpack.c.l.b16 %v185
    %v436 = vunpack.c.h.b16 %v185
    %v437 = vunpack.c.l.b16 %v186
    %v438 = vunpack.c.h.b16 %v186
    %v439 = vunpack.c.l.b16 %v187
    %v440 = vunpack.c.h.b16 %v187
    %v441 = vunpack.c.l.b16 %v188
    %v442 = vunpack.c.h.b16 %v188
    %v443 = vunpack.c.l.b16 %v189
    %v444 = vunpack.c.h.b16 %v189
    %v445 = vunpack.c.l.b16 %v190
    %v446 = vunpack.c.h.b16 %v190
    %v447 = vunpack.c.l.b16 %v191
    %v448 = vunpack.c.h.b16 %v191
    %v449 = vunpack.c.l.b16 %v192
    %v450 = vunpack.c.h.b16 %v192
    %v451 = vunpack.c.l.b16 %v193
    %v452 = vunpack.c.h.b16 %v193
    %v453 = vunpack.c.l.b16 %v194
    %v454 = vunpack.c.h.b16 %v194
    %v455 = vunpack.c.l.b16 %v195
    %v456 = vunpack.c.h.b16 %v195
    %v457 = vunpack.c.l.b16 %v196
    %v458 = vunpack.c.h.b16 %v196
    %v459 = vunpack.c.l.b16 %v197
    %v460 = vunpack.c.h.b16 %v197
    %v461 = vunpack.c.l.b16 %v198
    %v462 = vunpack.c.h.b16 %v198
    %v463 = vunpack.c.l.b16 %v199
    %v464 = vunpack.c.h.b16 %v199
    %v465 = vunpack.c.l.b16 %v200
    %v466 = vunpack.c.h.b16 %v200
    %v467 = vunpack.c.l.b16 %v201
    %v468 = vunpack.c.h.b16 %v201
    %v469 = vunpack.c.l.b16 %v202
    %v470 = vunpack.c.h.b16 %v202
    %v471 = vunpack.c.l.b16 %v203
    %v472 = vunpack.c.h.b16 %v203
    %v473 = vunpack.c.l.b16 %v204
    %v474 = vunpack.c.h.b16 %v204
    %v475 = vunpack.c.l.b16 %v205
    %v476 = vunpack.c.h.b16 %v205
    %v477 = vunpack.c.l.b16 %v206
    %v478 = vunpack.c.h.b16 %v206
    %v479 = vunpack.c.l.b16 %v207
    %v480 = vunpack.c.h.b16 %v207
    %v481 = vunpack.c.l.b16 %v208
    %v482 = vunpack.c.h.b16 %v208
    %v483 = vunpack.c.l.b16 %v209
    %v484 = vunpack.c.h.b16 %v209
    %v485 = vunpack.c.l.b16 %v210
    %v486 = vunpack.c.h.b16 %v210
    %v487 = vunpack.c.l.b16 %v211
    %v488 = vunpack.c.h.b16 %v211
    %v489 = vunpack.c.l.b16 %v212
    %v490 = vunpack.c.h.b16 %v212
    %v491 = vunpack.c.l.b16 %v213
    %v492 = vunpack.c.h.b16 %v213
    %v493 = vunpack.c.l.b16 %v214
    %v494 = vunpack.c.h.b16 %v214
    %v495 = vunpack.c.l.b16 %v215
    %v496 = vunpack.c.h.b16 %v215
    %v497 = vunpack.c.l.b16 %v216
    %v498 = vunpack.c.h.b16 %v216
    %v499 = vunpack.c.l.b16 %v217
    %v500 = vunpack.c.h.b16 %v217
    %v501 = vunpack.c.l.b16 %v218
    %v502 = vunpack.c.h.b16 %v218
    %v503 = vunpack.c.l.b16 %v219
    %v504 = vunpack.c.h.b16 %v219
    %v505 = vunpack.c.l.b16 %v220
    %v506 = vunpack.c.h.b16 %v220
    %v507 = vunpack.c.l.b16 %v221
    %v508 = vunpack.c.h.b16 %v221
    %v509 = vunpack.c.l.b16 %v222
    %v510 = vunpack.c.h.b16 %v222
    %v511 = vunpack.c.l.b16 %v223
    %v512 = vunpack.c.h.b16 %v223
    %v513 = vunpack.c.l.b16 %v224
    %v514 = vunpack.c.h.b16 %v224
    %v515 = vunpack.c.l.b16 %v225
    %v516 = vunpack.c.h.b16 %v225
    %v517 = vunpack.c.l.b16 %v226
    %v518 = vunpack.c.h.b16 %v226
    %v519 = vunpack.c.l.b16 %v227
    %v520 = vunpack.c.h.b16 %v227
    %v521 = vunpack.c.l.b16 %v228
    %v522 = vunpack.c.h.b16 %v228
    %v523 = vunpack.c.l.b16 %v229
    %v524 = vunpack.c.h.b16 %v229
    %v525 = vunpack.c.l.b16 %v230
    %v526 = vunpack.c.h.b16 %v230
    %v527 = vunpack.c.l.b16 %v231
    %v528 = vunpack.c.h.b16 %v231
    %v529 = vunpack.c.l.b16 %v232
    %v530 = vunpack.c.h.b16 %v232
    %v531 = vunpack.c.l.b16 %v233
    %v532 = vunpack.c.h.b16 %v233
    %v533 = vunpack.c.l.b16 %v234
    %v534 = vunpack.c.h.b16 %v234
    %v535 = vunpack.c.l.b16 %v235
    %v536 = vunpack.c.h.b16 %v235
    %v537 = vunpack.c.l.b16 %v236
    %v538 = vunpack.c.h.b16 %v236
    %v539 = vunpack.c.l.b16 %v237
    %v540 = vunpack.c.h.b16 %v237
    %v541 = vunpack.c.l.b16 %v238
    %v542 = vunpack.c.h.b16 %v238
    %v543 = vunpack.c.l.b16 %v239
    %v544 = vunpack.c.h.b16 %v239
    %v545 = vunpack.c.l.b16 %v240
    %v546 = vunpack.c.h.b16 %v240
    %v547 = vpack.c.b16 %v353, %v351
    %v548 = vpack.c.b16 %v354, %v352
    %v549 = vpack.c.b16 %v357, %v355
    %v550 = vpack.c.b16 %v358, %v356
    %v551 = vpack.c.b16 %v361, %v359
    %v552 = vpack.c.b16 %v362, %v360
    %v553 = vpack.c.b16 %v365, %v363
    %v554 = vpack.c.b16 %v366, %v364
    %v555 = vpack.c.b16 %v369, %v367
    %v556 = vpack.c.b16 %v370, %v368
    %v557 = vpack.c.b16 %v373, %v371
    %v558 = vpack.c.b16 %v374, %v372
    %v559 = vpack.c.b16 %v377, %v375
    %v560 = vpack.c.b16 %v378, %v376
    %v561 = vpack.c.b16 %v381, %v379
    %v562 = vpack.c.b16 %v382, %v380
    %v563 = vpack.c.b16 %v385, %v383
    %v564 = vpack.c.b16 %v386, %v384
    %v565 = vpack.c.b16 %v389, %v387
    %v566 = vpack.c.b16 %v390, %v388
    %v567 = vpack.c.b16 %v393, %v391
    %v568 = vpack.c.b16 %v394, %v392
    %v569 = vpack.c.b16 %v397, %v395
    %v570 = vpack.c.b16 %v398, %v396
    %v571 = vpack.c.b16 %v401, %v399
    %v572 = vpack.c.b16 %v402, %v400
    %v573 = vpack.c.b16 %v405, %v403
    %v574 = vpack.c.b16 %v406, %v404
    %v575 = vpack.c.b16 %v409, %v407
    %v576 = vpack.c.b16 %v410, %v408
    %v577 = vpack.c.b16 %v413, %v411
    %v578 = vpack.c.b16 %v414, %v412
    %v579 = vpack.c.b16 %v417, %v415
    %v580 = vpack.c.b16 %v418, %v416
    %v581 = vpack.c.b16 %v421, %v419
    %v582 = vpack.c.b16 %v422, %v420
    %v583 = vpack.c.b16 %v425, %v423
    %v584 = vpack.c.b16 %v426, %v424
    %v585 = vpack.c.b16 %v429, %v427
    %v586 = vpack.c.b16 %v430, %v428
    %v587 = vpack.c.b16 %v433, %v431
    %v588 = vpack.c.b16 %v434, %v432
    %v589 = vpack.c.b16 %v437, %v435
    %v590 = vpack.c.b16 %v438, %v436
    %v591 = vpack.c.b16 %v441, %v439
    %v592 = vpack.c.b16 %v442, %v440
    %v593 = vpack.c.b16 %v445, %v443
    %v594 = vpack.c.b16 %v446, %v444
    %v595 = vpack.c.b16 %v449, %v447
    %v596 = vpack.c.b16 %v450, %v448
    %v597 = vpack.c.b16 %v453, %v451
    %v598 = vpack.c.b16 %v454, %v452
    %v599 = vpack.c.b16 %v457, %v455
    %v600 = vpack.c.b16 %v458, %v456
    %v601 = vpack.c.b16 %v461, %v459
    %v602 = vpack.c.b16 %v462, %v460
    %v603 = vpack.c.b16 %v465, %v463
    %v604 = vpack.c.b16 %v466, %v464
    %v605 = vpack.c.b16 %v469, %v467
    %v606 = vpack.c.b16 %v470, %v468
    %v607 = vpack.c.b16 %v473, %v471
    %v608 = vpack.c.b16 %v474, %v472
    %v609 = vpack.c.b16 %v477, %v475
    %v610 = vpack.c.b16 %v478, %v476
    %v611 = vpack.c.b16 %v481, %v479
    %v612 = vpack.c.b16 %v482, %v480
    %v613 = vpack.c.b16 %v485, %v483
    %v614 = vpack.c.b16 %v486, %v484
    %v615 = vpack.c.b16 %v489, %v487
    %v616 = vpack.c.b16 %v490, %v488
    %v617 = vpack.c.b16 %v493, %v491
    %v618 = vpack.c.b16 %v494, %v492
    %v619 = vpack.c.b16 %v497, %v495
    %v620 = vpack.c.b16 %v498, %v496
    %v621 = vpack.c.b16 %v501, %v499
    %v622 = vpack.c.b16 %v502, %v500
    %v623 = vpack.c.b16 %v505, %v503
    %v624 = vpack.c.b16 %v506, %v504
    %v625 = vpack.c.b16 %v509, %v507
    %v626 = vpack.c.b16 %v510, %v508
    %v627 = vpack.c.b16 %v513, %v511
    %v628 = vpack.c.b16 %v514, %v512
    %v629 = vpack.c.b16 %v517, %v515
    %v630 = vpack.c.b16 %v518, %v516
    %v631 = vpack.c.b16 %v521, %v519
    %v632 = vpack.c.b16 %v522, %v520
    %v633 = vpack.c.b16 %v525, %v523
    %v634 = vpack.c.b16 %v526, %v524
    %v635 = vpack.c.b16 %v529, %v527
    %v636 = vpack.c.b16 %v530, %v528
    %v637 = vpack.c.b16 %v533, %v531
    %v638 = vpack.c.b16 %v534, %v532
    %v639 = vpack.c.b16 %v537, %v535
    %v640 = vpack.c.b16 %v538, %v536
    %v641 = vpack.c.b16 %v541, %v539
    %v642 = vpack.c.b16 %v542, %v540
    %v643 = vpack.c.b16 %v545, %v543
    %v644 = vpack.c.b16 %v546, %v544
    %vm743 = vcmask 130048
    %v745 = vsel %vm743, %v142, 0
    %747 = vmatprep.subr.bf16.mxu0 %v548
    %748 = vmatpush1.bf16.msra.mxu0 %v547
    %749 = vmatprep.subr.bf16.mxu0 %v550
    %750 = vmatpush1.bf16.msra.mxu0 %v549
    %751 = vmatprep.subr.bf16.mxu0 %v552
    %752 = vmatpush1.bf16.msra.mxu0 %v551
    %753 = vmatprep.subr.bf16.mxu0 %v554
    %754 = vmatpush1.bf16.msra.mxu0 %v553
    %755 = vmatprep.subr.bf16.mxu0 %v556
    %756 = vmatpush1.bf16.msra.mxu0 %v555
    %757 = vmatprep.subr.bf16.mxu0 %v558
    %758 = vmatpush1.bf16.msra.mxu0 %v557
    %759 = vmatprep.subr.bf16.mxu0 %v560
    %760 = vmatpush1.bf16.msra.mxu0 %v559
    %761 = vmatprep.subr.bf16.mxu0 %v562
    %762 = vmatpush1.bf16.msra.mxu0 %v561
    %763 = vmatprep.subr.bf16.mxu0 %v564
    %764 = vmatpush1.bf16.msra.mxu0 %v563
    %765 = vmatprep.subr.bf16.mxu0 %v566
    %766 = vmatpush1.bf16.msra.mxu0 %v565
    %767 = vmatprep.subr.bf16.mxu0 %v568
    %768 = vmatpush1.bf16.msra.mxu0 %v567
    %769 = vmatprep.subr.bf16.mxu0 %v570
    %770 = vmatpush1.bf16.msra.mxu0 %v569
    %771 = vmatprep.subr.bf16.mxu0 %v572
    %772 = vmatpush1.bf16.msra.mxu0 %v571
    %773 = vmatprep.subr.bf16.mxu0 %v574
    %774 = vmatpush1.bf16.msra.mxu0 %v573
    %775 = vmatprep.subr.bf16.mxu0 %v576
    %776 = vmatpush1.bf16.msra.mxu0 %v575
    %777 = vmatprep.subr.bf16.mxu0 %v578
    %778 = vmatpush1.bf16.msra.mxu0 %v577
    %779 = vmatprep.mubr.bf16.mxu0 %v137
    %780 = vmatmul.mubr.bf16.gmra.mrb[0].mxu0 %v136
    %v781 = vpop.f32.mrb[0].mxu0
    %v782 = vadd.f32 %v246, %v781
    %v783 = vpop.f32.mrb[0].mxu0
    %v784 = vadd.f32 %v250, %v783
    %v785 = vpop.f32.mrb[0].mxu0
    %v786 = vadd.f32 %v246, %v785
    %v787 = vpop.f32.mrb[0].mxu0
    %v788 = vadd.f32 %v250, %v787
    %789 = vdwg.mxu0
    %790 = vmatprep.subr.bf16.mxu0 %v580
    %791 = vmatpush1.bf16.msra.mxu0 %v579
    %792 = vmatprep.subr.bf16.mxu0 %v582
    %793 = vmatpush1.bf16.msra.mxu0 %v581
    %794 = vmatprep.subr.bf16.mxu0 %v584
    %795 = vmatpush1.bf16.msra.mxu0 %v583
    %796 = vmatprep.subr.bf16.mxu0 %v586
    %797 = vmatpush1.bf16.msra.mxu0 %v585
    %798 = vmatprep.subr.bf16.mxu0 %v588
    %799 = vmatpush1.bf16.msra.mxu0 %v587
    %800 = vmatprep.subr.bf16.mxu0 %v590
    %801 = vmatpush1.bf16.msra.mxu0 %v589
    %802 = vmatprep.subr.bf16.mxu0 %v592
    %803 = vmatpush1.bf16.msra.mxu0 %v591
    %804 = vmatprep.subr.bf16.mxu0 %v594
    %805 = vmatpush1.bf16.msra.mxu0 %v593
    %806 = vmatprep.subr.bf16.mxu0 %v596
    %807 = vmatpush1.bf16.msra.mxu0 %v595
    %808 = vmatprep.subr.bf16.mxu0 %v598
    %809 = vmatpush1.bf16.msra.mxu0 %v597
    %810 = vmatprep.subr.bf16.mxu0 %v600
    %811 = vmatpush1.bf16.msra.mxu0 %v599
    %812 = vmatprep.subr.bf16.mxu0 %v602
    %813 = vmatpush1.bf16.msra.mxu0 %v601
    %814 = vmatprep.subr.bf16.mxu0 %v604
    %815 = vmatpush1.bf16.msra.mxu0 %v603
    %816 = vmatprep.subr.bf16.mxu0 %v606
    %817 = vmatpush1.bf16.msra.mxu0 %v605
    %818 = vmatprep.subr.bf16.mxu0 %v608
    %819 = vmatpush1.bf16.msra.mxu0 %v607
    %820 = vmatprep.subr.bf16.mxu0 %v610
    %821 = vmatpush1.bf16.msra.mxu0 %v609
    %822 = vmatprep.mubr.bf16.mxu0 %v139
    %823 = vmatmul.mubr.bf16.gmra.mrb[0].mxu0 %v138
    %v824 = vpop.f32.mrb[0].mxu0
    %v825 = vadd.f32 %v782, %v824
    %v826 = vpop.f32.mrb[0].mxu0
    %v827 = vadd.f32 %v784, %v826
    %v828 = vpop.f32.mrb[0].mxu0
    %v829 = vadd.f32 %v786, %v828
    %v830 = vpop.f32.mrb[0].mxu0
    %v831 = vadd.f32 %v788, %v830
    %832 = vdwg.mxu0
    %833 = vmatprep.subr.bf16.mxu0 %v612
    %834 = vmatpush1.bf16.msra.mxu0 %v611
    %835 = vmatprep.subr.bf16.mxu0 %v614
    %836 = vmatpush1.bf16.msra.mxu0 %v613
    %837 = vmatprep.subr.bf16.mxu0 %v616
    %838 = vmatpush1.bf16.msra.mxu0 %v615
    %839 = vmatprep.subr.bf16.mxu0 %v618
    %840 = vmatpush1.bf16.msra.mxu0 %v617
    %841 = vmatprep.subr.bf16.mxu0 %v620
    %842 = vmatpush1.bf16.msra.mxu0 %v619
    %843 = vmatprep.subr.bf16.mxu0 %v622
    %844 = vmatpush1.bf16.msra.mxu0 %v621
    %845 = vmatprep.subr.bf16.mxu0 %v624
    %846 = vmatpush1.bf16.msra.mxu0 %v623
    %847 = vmatprep.subr.bf16.mxu0 %v626
    %848 = vmatpush1.bf16.msra.mxu0 %v625
    %849 = vmatprep.subr.bf16.mxu0 %v628
    %850 = vmatpush1.bf16.msra.mxu0 %v627
    %851 = vmatprep.subr.bf16.mxu0 %v630
    %852 = vmatpush1.bf16.msra.mxu0 %v629
    %853 = vmatprep.subr.bf16.mxu0 %v632
    %854 = vmatpush1.bf16.msra.mxu0 %v631
    %855 = vmatprep.subr.bf16.mxu0 %v634
    %856 = vmatpush1.bf16.msra.mxu0 %v633
    %857 = vmatprep.subr.bf16.mxu0 %v636
    %858 = vmatpush1.bf16.msra.mxu0 %v635
    %859 = vmatprep.subr.bf16.mxu0 %v638
    %860 = vmatpush1.bf16.msra.mxu0 %v637
    %861 = vmatprep.subr.bf16.mxu0 %v640
    %862 = vmatpush1.bf16.msra.mxu0 %v639
    %863 = vmatprep.subr.bf16.mxu0 %v642
    %864 = vmatpush1.bf16.msra.mxu0 %v641
    %865 = vmatprep.mubr.bf16.mxu0 %v141
    %866 = vmatmul.mubr.bf16.gmra.mrb[0].mxu0 %v140
    %v867 = vpop.f32.mrb[0].mxu0
    %v868 = vadd.f32 %v825, %v867
    %v869 = vpop.f32.mrb[0].mxu0
    %v870 = vadd.f32 %v827, %v869
    %v871 = vpop.f32.mrb[0].mxu0
    %v872 = vadd.f32 %v829, %v871
    %v873 = vpop.f32.mrb[0].mxu0
    %v874 = vadd.f32 %v831, %v873
    %875 = vdwg.mxu0
    %876 = vmatprep.subr.bf16.mxu0 %v644
    %877 = vmatpush1.bf16.msra.mxu0 %v643
    %878 = vmatprep.subr.bf16.mxu0 0
    %879 = vmatpush1.bf16.msra.mxu0 0
    %880 = vmatprep.subr.bf16.mxu0 0
    %881 = vmatpush1.bf16.msra.mxu0 0
    %882 = vmatprep.subr.bf16.mxu0 0
    %883 = vmatpush1.bf16.msra.mxu0 0
    %884 = vmatprep.subr.bf16.mxu0 0
    %885 = vmatpush1.bf16.msra.mxu0 0
    %886 = vmatprep.subr.bf16.mxu0 0
    %887 = vmatpush1.bf16.msra.mxu0 0
    %888 = vmatprep.subr.bf16.mxu0 0
    %889 = vmatpush1.bf16.msra.mxu0 0
    %890 = vmatprep.subr.bf16.mxu0 0
    %891 = vmatpush1.bf16.msra.mxu0 0
    %892 = vmatprep.subr.bf16.mxu0 0
    %893 = vmatpush1.bf16.msra.mxu0 0
    %894 = vmatprep.subr.bf16.mxu0 0
    %895 = vmatpush1.bf16.msra.mxu0 0
    %896 = vmatprep.subr.bf16.mxu0 0
    %897 = vmatpush1.bf16.msra.mxu0 0
    %898 = vmatprep.subr.bf16.mxu0 0
    %899 = vmatpush1.bf16.msra.mxu0 0
    %900 = vmatprep.subr.bf16.mxu0 0
    %901 = vmatpush1.bf16.msra.mxu0 0
    %902 = vmatprep.subr.bf16.mxu0 0
    %903 = vmatpush1.bf16.msra.mxu0 0
    %904 = vmatprep.subr.bf16.mxu0 0
    %905 = vmatpush1.bf16.msra.mxu0 0
    %906 = vmatprep.subr.bf16.mxu0 0
    %907 = vmatpush1.bf16.msra.mxu0 0
    %908 = vmatprep.mubr.bf16.mxu0 0
    %909 = vmatmul.mubr.bf16.gmra.mrb[0].mxu0 %v745
    %v910 = vpop.f32.mrb[0].mxu0
    %v911 = vadd.f32 %v868, %v910
    %v912 = vpop.f32.mrb[0].mxu0
    %v913 = vadd.f32 %v870, %v912
    %v914 = vpop.f32.mrb[0].mxu0
    %v915 = vadd.f32 %v872, %v914
    %v916 = vpop.f32.mrb[0].mxu0
    %v917 = vadd.f32 %v874, %v916
    %918 = vdwg.mxu0
    %v919 = vmax.f32 %v911, 0.0
    %v920 = vmax.f32 %v913, 0.0
    %v921 = vmax.f32 %v915, 0.0
    %v922 = vmax.f32 %v917, 0.0
    %v923 = vpack.c.bf16 %v921, %v919
    %v924 = vpack.c.bf16 %v922, %v920
    %v925 = vld [vmem:[#allocation7] sm:$0xf]
    %v926 = vld [vmem:[#allocation7 + $0x4] sm:$0xf]
    %v927 = vld [vmem:[#allocation7 + $0x8] sm:$0xf]
    %v928 = vld [vmem:[#allocation7 + $0xc] sm:$0xf]
    %v929 = vld [vmem:[#allocation7 + $0x10] sm:$0xf]
    %v930 = vld [vmem:[#allocation7 + $0x14] sm:$0xf]
    %v931 = vld [vmem:[#allocation7 + $0x18] sm:$0xf]
    %v932 = vld [vmem:[#allocation7 + $0x1c] sm:$0xf]
    %v933 = vld [vmem:[#allocation7 + $0x20] sm:$0xf]
    %v934 = vld [vmem:[#allocation7 + $0x24] sm:$0xf]
    %v935 = vld [vmem:[#allocation7 + $0x28] sm:$0xf]
    %v936 = vld [vmem:[#allocation7 + $0x2c] sm:$0xf]
    %v937 = vld [vmem:[#allocation7 + $0x30] sm:$0xf]
    %v938 = vld [vmem:[#allocation7 + $0x34] sm:$0xf]
    %v939 = vld [vmem:[#allocation7 + $0x38] sm:$0xf]
    %v940 = vld [vmem:[#allocation7 + $0x3c] sm:$0xf]
    %v941 = vld [vmem:[#allocation7 + $0x40] sm:$0xf]
    %v942 = vld [vmem:[#allocation7 + $0x44] sm:$0xf]
    %v943 = vld [vmem:[#allocation7 + $0x48] sm:$0xf]
    %v944 = vld [vmem:[#allocation7 + $0x4c] sm:$0xf]
    %v945 = vld [vmem:[#allocation7 + $0x50] sm:$0xf]
    %v946 = vld [vmem:[#allocation7 + $0x54] sm:$0xf]
    %v947 = vld [vmem:[#allocation7 + $0x58] sm:$0xf]
    %v948 = vld [vmem:[#allocation7 + $0x5c] sm:$0xf]
    %v949 = vld [vmem:[#allocation7 + $0x60] sm:$0xf]
    %v950 = vld [vmem:[#allocation7 + $0x64] sm:$0xf]
    %v951 = vld [vmem:[#allocation7 + $0x68] sm:$0xf]
    %v952 = vld [vmem:[#allocation7 + $0x6c] sm:$0xf]
    %v953 = vld [vmem:[#allocation7 + $0x70] sm:$0xf]
    %v954 = vld [vmem:[#allocation7 + $0x74] sm:$0xf]
    %v955 = vld [vmem:[#allocation7 + $0x78] sm:$0xf]
    %v956 = vld [vmem:[#allocation7 + $0x7c] sm:$0xf]
    %v957 = vld [vmem:[%s4] sm:$0x1]
    %v959 = vlaneseq
    %v960 = vshrl.u32 %v959, 7
    %v961 = vsub.s32 0, %v960
    %v962 = vrot.slane %v957, %v961
    %v996 = vunpack.c.l.b16 %v925
    %v997 = vunpack.c.l.b16 %v926
    %v998 = vunpack.c.l.b16 %v927
    %v999 = vunpack.c.l.b16 %v928
    %v1000 = vunpack.c.l.b16 %v929
    %v1001 = vunpack.c.l.b16 %v930
    %v1002 = vunpack.c.l.b16 %v931
    %v1003 = vunpack.c.l.b16 %v932
    %v1004 = vunpack.c.l.b16 %v933
    %v1005 = vunpack.c.l.b16 %v934
    %v1006 = vunpack.c.l.b16 %v935
    %v1007 = vunpack.c.l.b16 %v936
    %v1008 = vunpack.c.l.b16 %v937
    %v1009 = vunpack.c.l.b16 %v938
    %v1010 = vunpack.c.l.b16 %v939
    %v1011 = vunpack.c.l.b16 %v940
    %v1012 = vunpack.c.l.b16 %v941
    %v1013 = vunpack.c.l.b16 %v942
    %v1014 = vunpack.c.l.b16 %v943
    %v1015 = vunpack.c.l.b16 %v944
    %v1016 = vunpack.c.l.b16 %v945
    %v1017 = vunpack.c.l.b16 %v946
    %v1018 = vunpack.c.l.b16 %v947
    %v1019 = vunpack.c.l.b16 %v948
    %v1020 = vunpack.c.l.b16 %v949
    %v1021 = vunpack.c.l.b16 %v950
    %v1022 = vunpack.c.l.b16 %v951
    %v1023 = vunpack.c.l.b16 %v952
    %v1024 = vunpack.c.l.b16 %v953
    %v1025 = vunpack.c.l.b16 %v954
    %v1026 = vunpack.c.l.b16 %v955
    %v1027 = vunpack.c.l.b16 %v956
    %v1028 = vpack.c.b16 %v997, %v996
    %v1029 = vpack.c.b16 %v999, %v998
    %v1030 = vpack.c.b16 %v1001, %v1000
    %v1031 = vpack.c.b16 %v1003, %v1002
    %v1032 = vpack.c.b16 %v1005, %v1004
    %v1033 = vpack.c.b16 %v1007, %v1006
    %v1034 = vpack.c.b16 %v1009, %v1008
    %v1035 = vpack.c.b16 %v1011, %v1010
    %v1036 = vpack.c.b16 %v1013, %v1012
    %v1037 = vpack.c.b16 %v1015, %v1014
    %v1038 = vpack.c.b16 %v1017, %v1016
    %v1039 = vpack.c.b16 %v1019, %v1018
    %v1040 = vpack.c.b16 %v1021, %v1020
    %v1041 = vpack.c.b16 %v1023, %v1022
    %v1042 = vpack.c.b16 %v1025, %v1024
    %v1043 = vpack.c.b16 %v1027, %v1026
    %1060 = vmatprep.subr.bf16.mxu0 0
    %1061 = vmatpush1.bf16.msra.mxu0 %v1028
    %1062 = vmatprep.subr.bf16.mxu0 0
    %1063 = vmatpush1.bf16.msra.mxu0 %v1029
    %1064 = vmatprep.subr.bf16.mxu0 0
    %1065 = vmatpush1.bf16.msra.mxu0 %v1030
    %1066 = vmatprep.subr.bf16.mxu0 0
    %1067 = vmatpush1.bf16.msra.mxu0 %v1031
    %1068 = vmatprep.subr.bf16.mxu0 0
    %1069 = vmatpush1.bf16.msra.mxu0 %v1032
    %1070 = vmatprep.subr.bf16.mxu0 0
    %1071 = vmatpush1.bf16.msra.mxu0 %v1033
    %1072 = vmatprep.subr.bf16.mxu0 0
    %1073 = vmatpush1.bf16.msra.mxu0 %v1034
    %1074 = vmatprep.subr.bf16.mxu0 0
    %1075 = vmatpush1.bf16.msra.mxu0 %v1035
    %1076 = vmatprep.subr.bf16.mxu0 0
    %1077 = vmatpush1.bf16.msra.mxu0 %v1036
    %1078 = vmatprep.subr.bf16.mxu0 0
    %1079 = vmatpush1.bf16.msra.mxu0 %v1037
    %1080 = vmatprep.subr.bf16.mxu0 0
    %1081 = vmatpush1.bf16.msra.mxu0 %v1038
    %1082 = vmatprep.subr.bf16.mxu0 0
    %1083 = vmatpush1.bf16.msra.mxu0 %v1039
    %1084 = vmatprep.subr.bf16.mxu0 0
    %1085 = vmatpush1.bf16.msra.mxu0 %v1040
    %1086 = vmatprep.subr.bf16.mxu0 0
    %1087 = vmatpush1.bf16.msra.mxu0 %v1041
    %1088 = vmatprep.subr.bf16.mxu0 0
    %1089 = vmatpush1.bf16.msra.mxu0 %v1042
    %1090 = vmatprep.subr.bf16.mxu0 0
    %1091 = vmatpush1.bf16.msra.mxu0 %v1043
    %1092 = vmatprep.mubr.bf16.mxu0 %v924
    %1093 = vmatmul.mubr.bf16.gmra.mrb[0].mxu0 %v923
    %v1094 = vpop.f32.mrb[0].mxu0
    %v1095 = vadd.f32 %v962, %v1094
    %v1096 = vpop.f32.mrb[0].mxu0
    %v1097 = vpop.f32.mrb[0].mxu0
    %v1098 = vadd.f32 %v962, %v1097
    %v1099 = vpop.f32.mrb[0].mxu0
    %1100 = vdwg.mxu0
    %v1101 = vmax.f32 %v1095, 0.0
    %v1102 = vmax.f32 %v1098, 0.0
    %v1103 = vpack.c.bf16 %v1102, %v1101
    %v1104 = vld [vmem:[#allocation8] sm:$0xf]
    %v1105 = vld [vmem:[#allocation8 + $0x4] sm:$0xf]
    %v1106 = vld [vmem:[#allocation8 + $0x8] sm:$0xf]
    %v1107 = vld [vmem:[#allocation8 + $0xc] sm:$0xf]
    %v1108 = vld [vmem:[#allocation8 + $0x10] sm:$0xf]
    %v1109 = vld [vmem:[#allocation8 + $0x14] sm:$0xf]
    %v1110 = vld [vmem:[#allocation8 + $0x18] sm:$0xf]
    %v1111 = vld [vmem:[#allocation8 + $0x1c] sm:$0xf]
    %v1112 = vld [vmem:[#allocation8 + $0x20] sm:$0xf]
    %v1113 = vld [vmem:[#allocation8 + $0x24] sm:$0xf]
    %v1114 = vld [vmem:[#allocation8 + $0x28] sm:$0xf]
    %v1115 = vld [vmem:[#allocation8 + $0x2c] sm:$0xf]
    %v1116 = vld [vmem:[#allocation8 + $0x30] sm:$0xf]
    %v1117 = vld [vmem:[#allocation8 + $0x34] sm:$0xf]
    %v1118 = vld [vmem:[#allocation8 + $0x38] sm:$0xf]
    %v1119 = vld [vmem:[#allocation8 + $0x3c] sm:$0xf]
    %v1120 = vld [vmem:[%s6] sm:$0x1]
    %v1122 = vlaneseq
    %v1123 = vshrl.u32 %v1122, 7
    %v1124 = vsub.s32 0, %v1123
    %v1125 = vrot.slane %v1120, %v1124
    %v1143 = vunpack.c.l.b16 %v1104
    %v1144 = vunpack.c.l.b16 %v1105
    %v1145 = vunpack.c.l.b16 %v1106
    %v1146 = vunpack.c.l.b16 %v1107
    %v1147 = vunpack.c.l.b16 %v1108
    %v1148 = vunpack.c.l.b16 %v1109
    %v1149 = vunpack.c.l.b16 %v1110
    %v1150 = vunpack.c.l.b16 %v1111
    %v1151 = vunpack.c.l.b16 %v1112
    %v1152 = vunpack.c.l.b16 %v1113
    %v1153 = vunpack.c.l.b16 %v1114
    %v1154 = vunpack.c.l.b16 %v1115
    %v1155 = vunpack.c.l.b16 %v1116
    %v1156 = vunpack.c.l.b16 %v1117
    %v1157 = vunpack.c.l.b16 %v1118
    %v1158 = vunpack.c.l.b16 %v1119
    %v1159 = vpack.c.b16 %v1144, %v1143
    %v1160 = vpack.c.b16 %v1146, %v1145
    %v1161 = vpack.c.b16 %v1148, %v1147
    %v1162 = vpack.c.b16 %v1150, %v1149
    %v1163 = vpack.c.b16 %v1152, %v1151
    %v1164 = vpack.c.b16 %v1154, %v1153
    %v1165 = vpack.c.b16 %v1156, %v1155
    %v1166 = vpack.c.b16 %v1158, %v1157
    %1175 = vmatprep.subr.bf16.mxu0 0
    %1176 = vmatpush1.bf16.msra.mxu0 %v1159
    %1177 = vmatprep.subr.bf16.mxu0 0
    %1178 = vmatpush1.bf16.msra.mxu0 %v1160
    %1179 = vmatprep.subr.bf16.mxu0 0
    %1180 = vmatpush1.bf16.msra.mxu0 %v1161
    %1181 = vmatprep.subr.bf16.mxu0 0
    %1182 = vmatpush1.bf16.msra.mxu0 %v1162
    %1183 = vmatprep.subr.bf16.mxu0 0
    %1184 = vmatpush1.bf16.msra.mxu0 %v1163
    %1185 = vmatprep.subr.bf16.mxu0 0
    %1186 = vmatpush1.bf16.msra.mxu0 %v1164
    %1187 = vmatprep.subr.bf16.mxu0 0
    %1188 = vmatpush1.bf16.msra.mxu0 %v1165
    %1189 = vmatprep.subr.bf16.mxu0 0
    %1190 = vmatpush1.bf16.msra.mxu0 %v1166
    %1191 = vmatprep.subr.bf16.mxu0 0
    %1192 = vmatpush1.bf16.msra.mxu0 0
    %1193 = vmatprep.subr.bf16.mxu0 0
    %1194 = vmatpush1.bf16.msra.mxu0 0
    %1195 = vmatprep.subr.bf16.mxu0 0
    %1196 = vmatpush1.bf16.msra.mxu0 0
    %1197 = vmatprep.subr.bf16.mxu0 0
    %1198 = vmatpush1.bf16.msra.mxu0 0
    %1199 = vmatprep.subr.bf16.mxu0 0
    %1200 = vmatpush1.bf16.msra.mxu0 0
    %1201 = vmatprep.subr.bf16.mxu0 0
    %1202 = vmatpush1.bf16.msra.mxu0 0
    %1203 = vmatprep.subr.bf16.mxu0 0
    %1204 = vmatpush1.bf16.msra.mxu0 0
    %1205 = vmatprep.subr.bf16.mxu0 0
    %1206 = vmatpush1.bf16.msra.mxu0 0
    %1207 = vmatprep.mubr.bf16.mxu0 0
    %1208 = vmatmul.mubr.bf16.gmra.mrb[0].mxu0 %v1103
    %v1209 = vpop.f32.mrb[0].mxu0
    %v1210 = vadd.f32 %v1125, %v1209
    %v1211 = vpop.f32.mrb[0].mxu0
    %v1212 = vpop.f32.mrb[0].mxu0
    %v1213 = vadd.f32 %v1125, %v1212
    %v1214 = vpop.f32.mrb[0].mxu0
    %1215 = vdwg.mxu0
    %v1216 = vmax.f32 %v1210, 0.0
    %v1217 = vmax.f32 %v1213, 0.0
    %v1218 = vpack.c.bf16 %v1217, %v1216
    %v1219 = vld [vmem:[#allocation10] sm:$0xf]
    %v1220 = vld [vmem:[#allocation10 + $0x4] sm:$0xf]
    %v1221 = vld [vmem:[#allocation10 + $0x8] sm:$0xf]
    %v1222 = vld [vmem:[#allocation10 + $0xc] sm:$0xf]
    %v1223 = vld [vmem:[#allocation10 + $0x10] sm:$0xf]
    %v1224 = vld [vmem:[#allocation10 + $0x14] sm:$0xf]
    %v1225 = vld [vmem:[#allocation10 + $0x18] sm:$0xf]
    %v1226 = vld [vmem:[#allocation10 + $0x1c] sm:$0xf]
    %v1227 = vld [vmem:[#allocation10 + $0x20] sm:$0xf]
    %v1228 = vld [vmem:[#allocation10 + $0x24] sm:$0xf]
    %v1229 = vld [vmem:[#allocation10 + $0x28] sm:$0xf]
    %v1230 = vld [vmem:[#allocation10 + $0x2c] sm:$0xf]
    %v1231 = vld [vmem:[#allocation10 + $0x30] sm:$0xf]
    %v1232 = vld [vmem:[#allocation10 + $0x34] sm:$0xf]
    %v1233 = vld [vmem:[#allocation10 + $0x38] sm:$0xf]
    %v1234 = vld [vmem:[#allocation10 + $0x3c] sm:$0xf]
    %v1235 = vld [vmem:[%s8] sm:$0x1]
    %v1237 = vlaneseq
    %v1238 = vshrl.u32 %v1237, 7
    %v1239 = vsub.s32 0, %v1238
    %v1240 = vrot.slane %v1235, %v1239
    %v1258 = vunpack.c.l.b16 %v1219
    %v1259 = vunpack.c.l.b16 %v1220
    %v1260 = vunpack.c.l.b16 %v1221
    %v1261 = vunpack.c.l.b16 %v1222
    %v1262 = vunpack.c.l.b16 %v1223
    %v1263 = vunpack.c.l.b16 %v1224
    %v1264 = vunpack.c.l.b16 %v1225
    %v1265 = vunpack.c.l.b16 %v1226
    %v1266 = vunpack.c.l.b16 %v1227
    %v1267 = vunpack.c.l.b16 %v1228
    %v1268 = vunpack.c.l.b16 %v1229
    %v1269 = vunpack.c.l.b16 %v1230
    %v1270 = vunpack.c.l.b16 %v1231
    %v1271 = vunpack.c.l.b16 %v1232
    %v1272 = vunpack.c.l.b16 %v1233
    %v1273 = vunpack.c.l.b16 %v1234
    %v1274 = vpack.c.b16 %v1259, %v1258
    %v1275 = vpack.c.b16 %v1261, %v1260
    %v1276 = vpack.c.b16 %v1263, %v1262
    %v1277 = vpack.c.b16 %v1265, %v1264
    %v1278 = vpack.c.b16 %v1267, %v1266
    %v1279 = vpack.c.b16 %v1269, %v1268
    %v1280 = vpack.c.b16 %v1271, %v1270
    %v1281 = vpack.c.b16 %v1273, %v1272
    %1290 = vmatprep.subr.bf16.mxu0 0
    %1291 = vmatpush1.bf16.msra.mxu0 %v1274
    %1292 = vmatprep.subr.bf16.mxu0 0
    %1293 = vmatpush1.bf16.msra.mxu0 %v1275
    %1294 = vmatprep.subr.bf16.mxu0 0
    %1295 = vmatpush1.bf16.msra.mxu0 %v1276
    %1296 = vmatprep.subr.bf16.mxu0 0
    %1297 = vmatpush1.bf16.msra.mxu0 %v1277
    %1298 = vmatprep.subr.bf16.mxu0 0
    %1299 = vmatpush1.bf16.msra.mxu0 %v1278
    %1300 = vmatprep.subr.bf16.mxu0 0
    %1301 = vmatpush1.bf16.msra.mxu0 %v1279
    %1302 = vmatprep.subr.bf16.mxu0 0
    %1303 = vmatpush1.bf16.msra.mxu0 %v1280
    %1304 = vmatprep.subr.bf16.mxu0 0
    %1305 = vmatpush1.bf16.msra.mxu0 %v1281
    %1306 = vmatprep.subr.bf16.mxu0 0
    %1307 = vmatpush1.bf16.msra.mxu0 0
    %1308 = vmatprep.subr.bf16.mxu0 0
    %1309 = vmatpush1.bf16.msra.mxu0 0
    %1310 = vmatprep.subr.bf16.mxu0 0
    %1311 = vmatpush1.bf16.msra.mxu0 0
    %1312 = vmatprep.subr.bf16.mxu0 0
    %1313 = vmatpush1.bf16.msra.mxu0 0
    %1314 = vmatprep.subr.bf16.mxu0 0
    %1315 = vmatpush1.bf16.msra.mxu0 0
    %1316 = vmatprep.subr.bf16.mxu0 0
    %1317 = vmatpush1.bf16.msra.mxu0 0
    %1318 = vmatprep.subr.bf16.mxu0 0
    %1319 = vmatpush1.bf16.msra.mxu0 0
    %1320 = vmatprep.subr.bf16.mxu0 0
    %1321 = vmatpush1.bf16.msra.mxu0 0
    %1322 = vmatprep.mubr.bf16.mxu0 0
    %1323 = vmatmul.mubr.bf16.gmra.mrb[0].mxu0 %v1218
    %v1324 = vpop.f32.mrb[0].mxu0
    %v1325 = vadd.f32 %v1240, %v1324
    %v1326 = vpop.f32.mrb[0].mxu0
    %v1327 = vpop.f32.mrb[0].mxu0
    %v1328 = vadd.f32 %v1240, %v1327
    %v1329 = vpop.f32.mrb[0].mxu0
    %1330 = vdwg.mxu0
    %v1331 = vmax.f32 %v1325, 0.0
    %v1332 = vmax.f32 %v1328, 0.0
    %v1333 = vpack.c.bf16 %v1332, %v1331
    %v1334 = vld [vmem:[#allocation11] sm:$0xf]
    %v1335 = vld [vmem:[#allocation11 + $0x4] sm:$0xf]
    %v1336 = vld [vmem:[#allocation11 + $0x8] sm:$0xf]
    %v1337 = vld [vmem:[#allocation11 + $0xc] sm:$0xf]
    %v1338 = vld [vmem:[#allocation11 + $0x10] sm:$0xf]
    %v1339 = vld [vmem:[#allocation11 + $0x14] sm:$0xf]
    %v1340 = vld [vmem:[#allocation11 + $0x18] sm:$0xf]
    %v1341 = vld [vmem:[#allocation11 + $0x1c] sm:$0xf]
    %v1342 = vld [vmem:[#allocation11 + $0x20] sm:$0xf]
    %v1343 = vld [vmem:[#allocation11 + $0x24] sm:$0xf]
    %v1344 = vld [vmem:[#allocation11 + $0x28] sm:$0xf]
    %v1345 = vld [vmem:[#allocation11 + $0x2c] sm:$0xf]
    %v1346 = vld [vmem:[#allocation11 + $0x30] sm:$0xf]
    %v1347 = vld [vmem:[#allocation11 + $0x34] sm:$0xf]
    %v1348 = vld [vmem:[#allocation11 + $0x38] sm:$0xf]
    %v1349 = vld [vmem:[#allocation11 + $0x3c] sm:$0xf]
    %v1350 = vld [vmem:[%s10] sm:$0x1]
    %v1352 = vlaneseq
    %v1353 = vshrl.u32 %v1352, 7
    %v1354 = vsub.s32 0, %v1353
    %v1355 = vrot.slane %v1350, %v1354
    %v1373 = vunpack.c.l.b16 %v1334
    %v1374 = vunpack.c.l.b16 %v1335
    %v1375 = vunpack.c.l.b16 %v1336
    %v1376 = vunpack.c.l.b16 %v1337
    %v1377 = vunpack.c.l.b16 %v1338
    %v1378 = vunpack.c.l.b16 %v1339
    %v1379 = vunpack.c.l.b16 %v1340
    %v1380 = vunpack.c.l.b16 %v1341
    %v1381 = vunpack.c.l.b16 %v1342
    %v1382 = vunpack.c.l.b16 %v1343
    %v1383 = vunpack.c.l.b16 %v1344
    %v1384 = vunpack.c.l.b16 %v1345
    %v1385 = vunpack.c.l.b16 %v1346
    %v1386 = vunpack.c.l.b16 %v1347
    %v1387 = vunpack.c.l.b16 %v1348
    %v1388 = vunpack.c.l.b16 %v1349
    %v1389 = vpack.c.b16 %v1374, %v1373
    %v1390 = vpack.c.b16 %v1376, %v1375
    %v1391 = vpack.c.b16 %v1378, %v1377
    %v1392 = vpack.c.b16 %v1380, %v1379
    %v1393 = vpack.c.b16 %v1382, %v1381
    %v1394 = vpack.c.b16 %v1384, %v1383
    %v1395 = vpack.c.b16 %v1386, %v1385
    %v1396 = vpack.c.b16 %v1388, %v1387
    %1405 = vmatprep.subr.bf16.mxu0 0
    %1406 = vmatpush1.bf16.msra.mxu0 %v1389
    %1407 = vmatprep.subr.bf16.mxu0 0
    %1408 = vmatpush1.bf16.msra.mxu0 %v1390
    %1409 = vmatprep.subr.bf16.mxu0 0
    %1410 = vmatpush1.bf16.msra.mxu0 %v1391
    %1411 = vmatprep.subr.bf16.mxu0 0
    %1412 = vmatpush1.bf16.msra.mxu0 %v1392
    %1413 = vmatprep.subr.bf16.mxu0 0
    %1414 = vmatpush1.bf16.msra.mxu0 %v1393
    %1415 = vmatprep.subr.bf16.mxu0 0
    %1416 = vmatpush1.bf16.msra.mxu0 %v1394
    %1417 = vmatprep.subr.bf16.mxu0 0
    %1418 = vmatpush1.bf16.msra.mxu0 %v1395
    %1419 = vmatprep.subr.bf16.mxu0 0
    %1420 = vmatpush1.bf16.msra.mxu0 %v1396
    %1421 = vmatprep.subr.bf16.mxu0 0
    %1422 = vmatpush1.bf16.msra.mxu0 0
    %1423 = vmatprep.subr.bf16.mxu0 0
    %1424 = vmatpush1.bf16.msra.mxu0 0
    %1425 = vmatprep.subr.bf16.mxu0 0
    %1426 = vmatpush1.bf16.msra.mxu0 0
    %1427 = vmatprep.subr.bf16.mxu0 0
    %1428 = vmatpush1.bf16.msra.mxu0 0
    %1429 = vmatprep.subr.bf16.mxu0 0
    %1430 = vmatpush1.bf16.msra.mxu0 0
    %1431 = vmatprep.subr.bf16.mxu0 0
    %1432 = vmatpush1.bf16.msra.mxu0 0
    %1433 = vmatprep.subr.bf16.mxu0 0
    %1434 = vmatpush1.bf16.msra.mxu0 0
    %1435 = vmatprep.subr.bf16.mxu0 0
    %1436 = vmatpush1.bf16.msra.mxu0 0
    %1437 = vmatprep.mubr.bf16.mxu0 0
    %1438 = vmatmul.mubr.bf16.gmra.mrb[0].mxu0 %v1333
    %v1439 = vpop.f32.mrb[0].mxu0
    %v1440 = vadd.f32 %v1355, %v1439
    %v1441 = vpop.f32.mrb[0].mxu0
    %v1442 = vpop.f32.mrb[0].mxu0
    %v1443 = vadd.f32 %v1355, %v1442
    %v1444 = vpop.f32.mrb[0].mxu0
    %1445 = vdwg.mxu0
    %v1446 = vpack.c.bf16 %v1443, %v1440
    %v1448 = vunpack.c.l.b16 %v1446
    %v1449 = vunpack.c.h.b16 %v1446
    %v1450 = vpack.c.b16 %v1448, %v1448
    %v1451 = vpack.c.b16 %v1449, %v1449
    %1454 = vst [vmem:[#allocation13] sm:$0xf] %v1450
    %1455 = vst [vmem:[#allocation13 + $0x4] sm:$0xf] %v1451
    // Predicated region
    $region70: #{tpu_custom_call.1} parent=1 // pred_check
      _
    $region71: #{tpu_custom_call.1} parent=1 // pred_check_branch
      %1457 = sbr.rel (0) target = $region73
    $region72: #{tpu_custom_call.1} parent=1 // pred_region
      %s1459 = ssub.s32 128, 128
      %1460 = vsyncadd [#allocation4], %s1459
      %s1461 = sshll.u32 [#allocation13], 4
      %s1462 = int_to_ptr.vmem [resolvable:$true] %s1461
      %1467 = dma.vmem_to_hbm [thread:$0]  %s1462, 128, %s11, [#allocation4], 64, 64, 4
    $region73: #{tpu_custom_call.1} parent=1 // pred_fallthru
      _
    // Predicated region
    $region74: #{tpu_custom_call.1} parent=1 // pred_check
      _
    $region75: #{tpu_custom_call.1} parent=1 // pred_check_branch
      %1469 = sbr.rel (0) target = $region77
    $region76: #{tpu_custom_call.1} parent=1 // pred_region
      %1470 = dma.done [#allocation4], 128
    $region77: #{tpu_custom_call.1} parent=1 // pred_fallthru
      _
    %1471 = vsyncpa [#allocation3], 1
    %1472 = vsyncpa [#allocation6], 1
    %1473 = vsyncpa [#allocation9], 1
    %1474 = vsyncpa [#allocation12], 1
    %1475 = vsyncpa [#allocation4], 1

</llo_original>
